<compile_context>
chip_gen: v7x
topology: tpu7x:2x2x1
jax: 0.10.0
libtpu: 0.0.40
codegen_flags: <defaults>
</compile_context>

<pallas_src>
import functools

import jax
import jax.numpy as jnp
import numpy as np
from jax.experimental import pallas as pl
from jax.experimental.pallas import tpu as pltpu

LANE = 128
SUBLANE = 8
SUBLANE_BF16 = 16


def _round_up(n, m):
    return ((n + m - 1) // m) * m


def _bf16_elementwise_ok():
    """bf16 EUP/VALU exist on v6e/v7x; keep f32 elementwise on v5e and older."""
    kind = jax.devices()[0].device_kind.lower()
    return not any(t in kind for t in ("v2", "v3", "v4", "v5"))


def multiblock_kernel(x_ref, w1_ref, b1_ref, w2_ref, b2_ref, wo_ref, bo_ref,
                      o_ref, xpad_ref, *, bf16_tanh):
    # x_ref : (TB, D)   bf16      w1_ref: (L, Dp, Hp) bf16   b1_ref: (L, Hp) f32
    # w2_ref: (L, Hp, Dp) bf16    b2_ref: (L, Dp) f32
    # wo_ref: (Dp, Op) bf16       bo_ref: (1, Op) f32
    # o_ref : (TB, O)  f32        xpad_ref: (TB, Dp) f32 scratch
    D = x_ref.shape[-1]
    L = w1_ref.shape[0]
    O = o_ref.shape[-1]

    # Pad lanes [D:Dp] only need zeroing once; scratch persists across the grid.
    @pl.when(pl.program_id(0) == 0)
    def _():
        xpad_ref[...] = jnp.zeros_like(xpad_ref)

    # In-kernel pad of x to Dp=128 (masked VMEM store, hidden under MXU work).
    xpad_ref[:, :D] = x_ref[...].astype(jnp.float32)
    x = xpad_ref[...]                       # residual stream stays f32

    # L is small (num_blocks * num_layers_per_block = 4): static unroll.
    # TODO(synk): if L*Dp*Hp grows, move L onto an 'arbitrary' grid axis and
    # stream w1[l]/w2[l] per step; size the threshold against v7x's 64 MiB VMEM.
    for l in range(L):
        h = jnp.dot(x.astype(jnp.bfloat16), w1_ref[l],
                    preferred_element_type=jnp.float32)
        h = h + b1_ref[pl.ds(l, 1), :]      # (1, Hp) broadcast, f32
        if bf16_tanh:                       # v6e/v7x: bf16 EUP, halves h footprint
            h = jnp.tanh(h.astype(jnp.bfloat16))
        else:                               # v5e-safe: f32 tanh, cast after
            h = jnp.tanh(h).astype(jnp.bfloat16)
        y = jnp.dot(h, w2_ref[l], preferred_element_type=jnp.float32)
        y = y + b2_ref[pl.ds(l, 1), :]
        x = x + y                           # residual: x_{l+1} = x_l + MLP_l(x_l)

    out = jnp.dot(x.astype(jnp.bfloat16), wo_ref[...],
                  preferred_element_type=jnp.float32) + bo_ref[...]
    # Store only the real O columns (masked vst); avoids the 32x-padded
    # writeback + wrapper column-slice pass.
    o_ref[...] = out[:, :O].astype(o_ref.dtype)


def pad_params(params):
    """One-time layout prep: pad feature dims to 128 and cast weights to bf16."""
    w1, b1, w2, b2, wo, bo = params
    L, D, H = w1.shape
    O = wo.shape[-1]
    Dp, Hp, Op = _round_up(D, LANE), _round_up(H, LANE), _round_up(O, LANE)
    bf = jnp.bfloat16
    w1p = jnp.zeros((L, Dp, Hp), bf).at[:, :D, :H].set(w1.astype(bf))
    b1p = jnp.zeros((L, Hp), jnp.float32).at[:, :H].set(b1.reshape(L, H))
    w2p = jnp.zeros((L, Hp, Dp), bf).at[:, :H, :D].set(w2.astype(bf))
    b2p = jnp.zeros((L, Dp), jnp.float32).at[:, :D].set(b2.reshape(L, D))
    wop = jnp.zeros((Dp, Op), bf).at[:D, :O].set(wo.astype(bf))
    bop = jnp.zeros((1, Op), jnp.float32).at[:, :O].set(bo.reshape(1, O))
    return w1p, b1p, w2p, b2p, wop, bop


@functools.partial(jax.jit, static_argnames=("output_dim", "tb_max"))
def multiblock_regressor(x, padded_params, *, output_dim, tb_max=128):
    w1, b1, w2, b2, wo, bo = padded_params
    B, D = x.shape
    Dp = w1.shape[1]

    # Batch tile: multiple of 16 (bf16 input packing), capped at tb_max=128 to
    # avoid vreg spills in the unrolled 4-layer loop, and sized from cdiv(B,2)
    # so B > tb always gives >= 2 grid steps (both TCs get work on v7x).
    tb = min(tb_max, max(SUBLANE_BF16, _round_up(-(-B // 2), SUBLANE_BF16)))
    Bp = _round_up(B, tb)

    # Input fed unpadded in D and as bf16 (halves input DMA bytes); padded
    # batch rows (if any) are zeros and row-sliced off afterwards.
    xb = x.astype(jnp.bfloat16)
    x_p = xb if Bp == B else jnp.zeros((Bp, D), jnp.bfloat16).at[:B].set(xb)

    kern = functools.partial(multiblock_kernel, bf16_tanh=_bf16_elementwise_ok())

    # TODO(synk): grid-invariant weight/bias operands could be single-buffered
    # via pipeline_mode=pl.Buffered(1); negligible VMEM (~0.2 MiB) at these sizes.
    out_p = pl.pallas_call(
        kern,
        out_shape=jax.ShapeDtypeStruct((Bp, output_dim), jnp.float32),
        grid_spec=pltpu.PrefetchScalarGridSpec(
            num_scalar_prefetch=0,
            grid=(Bp // tb,),
            in_specs=[
                pl.BlockSpec((tb, D), lambda i: (i, 0)),          # x (unpadded D)
                pl.BlockSpec(w1.shape, lambda i: (0, 0, 0)),      # grid-invariant
                pl.BlockSpec(b1.shape, lambda i: (0, 0)),
                pl.BlockSpec(w2.shape, lambda i: (0, 0, 0)),
                pl.BlockSpec(b2.shape, lambda i: (0, 0)),
                pl.BlockSpec(wo.shape, lambda i: (0, 0)),
                pl.BlockSpec(bo.shape, lambda i: (0, 0)),
            ],
            out_specs=pl.BlockSpec((tb, output_dim), lambda i: (i, 0)),
            scratch_shapes=[pltpu.VMEM((tb, Dp), jnp.float32)],   # in-kernel x pad
        ),
        compiler_params=pltpu.CompilerParams(
            dimension_semantics=("parallel",)),
    )(x_p, w1, b1, w2, b2, wo, bo)
    return out_p if Bp == B else out_p[:B]


def init_params(key, input_dim, hidden_dim, output_dim, num_blocks, num_layers_per_block):
    """Deterministic PyTorch-style (uniform +/- 1/sqrt(fan_in)) init, f32."""
    L = num_blocks * num_layers_per_block

    def uniform(k, shape, fan_in):
        bound = 1.0 / np.sqrt(fan_in)
        return jax.random.uniform(k, shape, jnp.float32, -bound, bound)

    ks = jax.random.split(key, 4 * L + 2)
    w1 = jnp.stack([uniform(ks[4 * l + 0], (input_dim, hidden_dim), input_dim) for l in range(L)])
    b1 = jnp.stack([uniform(ks[4 * l + 1], (hidden_dim,), input_dim) for l in range(L)])
    w2 = jnp.stack([uniform(ks[4 * l + 2], (hidden_dim, input_dim), hidden_dim) for l in range(L)])
    b2 = jnp.stack([uniform(ks[4 * l + 3], (input_dim,), hidden_dim) for l in range(L)])
    wo = uniform(ks[-2], (input_dim, output_dim), input_dim)   # output_proj (input_dim != output_dim)
    bo = uniform(ks[-1], (output_dim,), input_dim)
    return w1, b1, w2, b2, wo, bo


def ref_forward(x, params, *, bf16_matmul=False, bf16_input=False, bf16_tanh=False):
    """Pure-JAX reference; flags mirror the kernel's dtype choices."""
    w1, b1, w2, b2, wo, bo = params
    cast = (lambda a: a.astype(jnp.bfloat16)) if bf16_matmul else (lambda a: a)
    if bf16_input:
        x = x.astype(jnp.bfloat16)
    x = x.astype(jnp.float32)
    for l in range(w1.shape[0]):
        h = jnp.dot(cast(x), cast(w1[l]), preferred_element_type=jnp.float32) + b1[l]
        h = jnp.tanh(h.astype(jnp.bfloat16)) if bf16_tanh else jnp.tanh(h)
        x = x + jnp.dot(cast(h), cast(w2[l]), preferred_element_type=jnp.float32) + b2[l]
    return jnp.dot(cast(x), cast(wo), preferred_element_type=jnp.float32) + bo


if __name__ == "__main__":
    # Shapes consistent with the (batch, input_dim) forward contract.
    B, D, H, O = 8, 8, 32, 4
    num_blocks, num_layers_per_block = 2, 2

    key = jax.random.PRNGKey(0)
    kx, kp, kx2 = jax.random.split(key, 3)
    x = jax.random.normal(kx, (B, D), dtype=jnp.float32)
    params = init_params(kp, D, H, O, num_blocks, num_layers_per_block)
    padded_params = pad_params(params)   # one-time layout prep (pad + bf16)

    bf16_tanh = _bf16_elementwise_ok()

    # TODO(synk): LoRA path (lora_rank > 0) and sigmoid gating not exercised;
    # the default module config has lora_rank=0 so the forward is exactly this.

    # Small case (single grid step).
    out = jax.block_until_ready(multiblock_regressor(x, padded_params, output_dim=O))
    ref_match = ref_forward(x, params, bf16_matmul=True, bf16_input=True, bf16_tanh=bf16_tanh)
    ref_f32 = ref_forward(x, params)
    np.testing.assert_allclose(np.asarray(out), np.asarray(ref_match), rtol=3e-2, atol=3e-2)
    np.testing.assert_allclose(np.asarray(out), np.asarray(ref_f32), rtol=1e-1, atol=1e-1)

    # Larger batch: multi-step "parallel" grid (tb=128 -> 4 steps; both
    # TensorCores get work on v7x).
    B2 = 512
    x2 = jax.random.normal(kx2, (B2, D), dtype=jnp.float32)
    out2 = jax.block_until_ready(multiblock_regressor(x2, padded_params, output_dim=O))
    ref2 = ref_forward(x2, params, bf16_matmul=True, bf16_input=True, bf16_tanh=bf16_tanh)
    np.testing.assert_allclose(np.asarray(out2), np.asarray(ref2), rtol=3e-2, atol=3e-2)

    print("KERNEL_OK")
</pallas_src>

<mosaic_0001>
module attributes {stable_mosaic.version = 11 : i64} {
  func.func @multiblock_kernel(%arg0: i32, %arg1: memref<16x8xbf16, #tpu.memory_space<vmem>>, %arg2: memref<4x128x128xbf16, #tpu.memory_space<vmem>>, %arg3: memref<4x128xf32, #tpu.memory_space<vmem>>, %arg4: memref<4x128x128xbf16, #tpu.memory_space<vmem>>, %arg5: memref<4x128xf32, #tpu.memory_space<vmem>>, %arg6: memref<128x128xbf16, #tpu.memory_space<vmem>>, %arg7: memref<1x128xf32, #tpu.memory_space<vmem>>, %arg8: memref<16x4xf32, #tpu.memory_space<vmem>>, %arg9: memref<16x128xf32, #tpu.memory_space<vmem>>) attributes {dimension_semantics = [#tpu.dimension_semantics<parallel>], iteration_bounds = array<i64: 1>, scalar_prefetch = 0 : i64, scratch_operands = 1 : i64, tpu.core_type = #tpu.core_type<tc>, window_params = [{transform_indices = @transform_0, window_bounds = array<i64: 16, 8>}, {pipeline_mode = #tpu.pipeline_mode<synchronous>, transform_indices = @transform_1, window_bounds = array<i64: 4, 128, 128>}, {pipeline_mode = #tpu.pipeline_mode<synchronous>, transform_indices = @transform_2, window_bounds = array<i64: 4, 128>}, {pipeline_mode = #tpu.pipeline_mode<synchronous>, transform_indices = @transform_3, window_bounds = array<i64: 4, 128, 128>}, {pipeline_mode = #tpu.pipeline_mode<synchronous>, transform_indices = @transform_4, window_bounds = array<i64: 4, 128>}, {pipeline_mode = #tpu.pipeline_mode<synchronous>, transform_indices = @transform_5, window_bounds = array<i64: 128, 128>}, {pipeline_mode = #tpu.pipeline_mode<synchronous>, transform_indices = @transform_6, window_bounds = array<i64: 1, 128>}, {transform_indices = @transform_7, window_bounds = array<i64: 16, 4>}]} {
    %c0_i32 = arith.constant 0 : i32
    %0 = arith.cmpi eq, %arg0, %c0_i32 : i32
    %1 = arith.extui %0 : i1 to i32
    %c0_i32_0 = arith.constant 0 : i32
    %2 = arith.cmpi ne, %1, %c0_i32_0 : i32
    scf.if %2 {
      %cst_57 = arith.constant 0.000000e+00 : f32
      %79 = vector.broadcast %cst_57 : f32 to vector<16x128xf32>
      %c0_58 = arith.constant 0 : index
      %c0_59 = arith.constant 0 : index
      %80 = vector.load %arg9[%c0_58, %c0_59] : memref<16x128xf32, #tpu.memory_space<vmem>>, vector<16x128xf32>
      tpu.vector_store %arg9[%c0_58, %c0_59], %79 {strides = array<i32>} : memref<16x128xf32, #tpu.memory_space<vmem>>, vector<16x128xf32>,
    } else {
    }
    %c0 = arith.constant 0 : index
    %c0_1 = arith.constant 0 : index
    %3 = vector.load %arg1[%c0, %c0_1] : memref<16x8xbf16, #tpu.memory_space<vmem>>, vector<16x8xbf16>
    %4 = arith.extf %3 : vector<16x8xbf16> to vector<16x8xf32>
    %c0_2 = arith.constant 0 : index
    %c0_3 = arith.constant 0 : index
    %5 = vector.load %arg9[%c0_2, %c0_3] : memref<16x128xf32, #tpu.memory_space<vmem>>, vector<16x8xf32>
    tpu.vector_store %arg9[%c0_2, %c0_3], %4 {strides = array<i32>} : memref<16x128xf32, #tpu.memory_space<vmem>>, vector<16x8xf32>,
    %c0_4 = arith.constant 0 : index
    %c0_5 = arith.constant 0 : index
    %6 = vector.load %arg9[%c0_4, %c0_5] : memref<16x128xf32, #tpu.memory_space<vmem>>, vector<16x128xf32>
    %7 = arith.truncf %6 : vector<16x128xf32> to vector<16x128xbf16>
    %c0_6 = arith.constant 0 : index
    %c0_7 = arith.constant 0 : index
    %c0_8 = arith.constant 0 : index
    %8 = vector.load %arg2[%c0_6, %c0_7, %c0_8] : memref<4x128x128xbf16, #tpu.memory_space<vmem>>, vector<1x128x128xbf16>
    %9 = vector.shape_cast %8 : vector<1x128x128xbf16> to vector<128x128xbf16>
    %cst = arith.constant dense<0.000000e+00> : vector<16x128xf32>
    %10 = tpu.matmul %7, %9, %cst {dimension_numbers = #tpu.dot_dimension_numbers<[1], [0], [0], [1], [0, 0, 1, 1], [], []>} : vector<16x128xbf16>, vector<128x128xbf16>, vector<16x128xf32> -> vector<16x128xf32>
    %c0_9 = arith.constant 0 : index
    %c0_10 = arith.constant 0 : index
    %11 = vector.load %arg3[%c0_9, %c0_10] : memref<4x128xf32, #tpu.memory_space<vmem>>, vector<1x128xf32>
    %12 = vector.broadcast %11 : vector<1x128xf32> to vector<16x128xf32>
    %13 = arith.addf %10, %12 : vector<16x128xf32>
    %14 = arith.truncf %13 : vector<16x128xf32> to vector<16x128xbf16>
    %15 = math.tanh %14 : vector<16x128xbf16>
    %c0_11 = arith.constant 0 : index
    %c0_12 = arith.constant 0 : index
    %c0_13 = arith.constant 0 : index
    %16 = vector.load %arg4[%c0_11, %c0_12, %c0_13] : memref<4x128x128xbf16, #tpu.memory_space<vmem>>, vector<1x128x128xbf16>
    %17 = vector.shape_cast %16 : vector<1x128x128xbf16> to vector<128x128xbf16>
    %cst_14 = arith.constant dense<0.000000e+00> : vector<16x128xf32>
    %18 = tpu.matmul %15, %17, %cst_14 {dimension_numbers = #tpu.dot_dimension_numbers<[1], [0], [0], [1], [0, 0, 1, 1], [], []>} : vector<16x128xbf16>, vector<128x128xbf16>, vector<16x128xf32> -> vector<16x128xf32>
    %c0_15 = arith.constant 0 : index
    %c0_16 = arith.constant 0 : index
    %19 = vector.load %arg5[%c0_15, %c0_16] : memref<4x128xf32, #tpu.memory_space<vmem>>, vector<1x128xf32>
    %20 = vector.broadcast %19 : vector<1x128xf32> to vector<16x128xf32>
    %21 = arith.addf %18, %20 : vector<16x128xf32>
    %22 = arith.addf %6, %21 : vector<16x128xf32>
    %23 = arith.truncf %22 : vector<16x128xf32> to vector<16x128xbf16>
    %c1 = arith.constant 1 : index
    %c0_17 = arith.constant 0 : index
    %c0_18 = arith.constant 0 : index
    %24 = vector.load %arg2[%c1, %c0_17, %c0_18] : memref<4x128x128xbf16, #tpu.memory_space<vmem>>, vector<1x128x128xbf16>
    %25 = vector.shape_cast %24 : vector<1x128x128xbf16> to vector<128x128xbf16>
    %cst_19 = arith.constant dense<0.000000e+00> : vector<16x128xf32>
    %26 = tpu.matmul %23, %25, %cst_19 {dimension_numbers = #tpu.dot_dimension_numbers<[1], [0], [0], [1], [0, 0, 1, 1], [], []>} : vector<16x128xbf16>, vector<128x128xbf16>, vector<16x128xf32> -> vector<16x128xf32>
    %c1_20 = arith.constant 1 : index
    %c0_21 = arith.constant 0 : index
    %27 = vector.load %arg3[%c1_20, %c0_21] : memref<4x128xf32, #tpu.memory_space<vmem>>, vector<1x128xf32>
    %28 = vector.broadcast %27 : vector<1x128xf32> to vector<16x128xf32>
    %29 = arith.addf %26, %28 : vector<16x128xf32>
    %30 = arith.truncf %29 : vector<16x128xf32> to vector<16x128xbf16>
    %31 = math.tanh %30 : vector<16x128xbf16>
    %c1_22 = arith.constant 1 : index
    %c0_23 = arith.constant 0 : index
    %c0_24 = arith.constant 0 : index
    %32 = vector.load %arg4[%c1_22, %c0_23, %c0_24] : memref<4x128x128xbf16, #tpu.memory_space<vmem>>, vector<1x128x128xbf16>
    %33 = vector.shape_cast %32 : vector<1x128x128xbf16> to vector<128x128xbf16>
    %cst_25 = arith.constant dense<0.000000e+00> : vector<16x128xf32>
    %34 = tpu.matmul %31, %33, %cst_25 {dimension_numbers = #tpu.dot_dimension_numbers<[1], [0], [0], [1], [0, 0, 1, 1], [], []>} : vector<16x128xbf16>, vector<128x128xbf16>, vector<16x128xf32> -> vector<16x128xf32>
    %c1_26 = arith.constant 1 : index
    %c0_27 = arith.constant 0 : index
    %35 = vector.load %arg5[%c1_26, %c0_27] : memref<4x128xf32, #tpu.memory_space<vmem>>, vector<1x128xf32>
    %36 = vector.broadcast %35 : vector<1x128xf32> to vector<16x128xf32>
    %37 = arith.addf %34, %36 : vector<16x128xf32>
    %38 = arith.addf %22, %37 : vector<16x128xf32>
    %39 = arith.truncf %38 : vector<16x128xf32> to vector<16x128xbf16>
    %c2 = arith.constant 2 : index
    %c0_28 = arith.constant 0 : index
    %c0_29 = arith.constant 0 : index
    %40 = vector.load %arg2[%c2, %c0_28, %c0_29] : memref<4x128x128xbf16, #tpu.memory_space<vmem>>, vector<1x128x128xbf16>
    %41 = vector.shape_cast %40 : vector<1x128x128xbf16> to vector<128x128xbf16>
    %cst_30 = arith.constant dense<0.000000e+00> : vector<16x128xf32>
    %42 = tpu.matmul %39, %41, %cst_30 {dimension_numbers = #tpu.dot_dimension_numbers<[1], [0], [0], [1], [0, 0, 1, 1], [], []>} : vector<16x128xbf16>, vector<128x128xbf16>, vector<16x128xf32> -> vector<16x128xf32>
    %c2_31 = arith.constant 2 : index
    %c0_32 = arith.constant 0 : index
    %43 = vector.load %arg3[%c2_31, %c0_32] : memref<4x128xf32, #tpu.memory_space<vmem>>, vector<1x128xf32>
    %44 = vector.broadcast %43 : vector<1x128xf32> to vector<16x128xf32>
    %45 = arith.addf %42, %44 : vector<16x128xf32>
    %46 = arith.truncf %45 : vector<16x128xf32> to vector<16x128xbf16>
    %47 = math.tanh %46 : vector<16x128xbf16>
    %c2_33 = arith.constant 2 : index
    %c0_34 = arith.constant 0 : index
    %c0_35 = arith.constant 0 : index
    %48 = vector.load %arg4[%c2_33, %c0_34, %c0_35] : memref<4x128x128xbf16, #tpu.memory_space<vmem>>, vector<1x128x128xbf16>
    %49 = vector.shape_cast %48 : vector<1x128x128xbf16> to vector<128x128xbf16>
    %cst_36 = arith.constant dense<0.000000e+00> : vector<16x128xf32>
    %50 = tpu.matmul %47, %49, %cst_36 {dimension_numbers = #tpu.dot_dimension_numbers<[1], [0], [0], [1], [0, 0, 1, 1], [], []>} : vector<16x128xbf16>, vector<128x128xbf16>, vector<16x128xf32> -> vector<16x128xf32>
    %c2_37 = arith.constant 2 : index
    %c0_38 = arith.constant 0 : index
    %51 = vector.load %arg5[%c2_37, %c0_38] : memref<4x128xf32, #tpu.memory_space<vmem>>, vector<1x128xf32>
    %52 = vector.broadcast %51 : vector<1x128xf32> to vector<16x128xf32>
    %53 = arith.addf %50, %52 : vector<16x128xf32>
    %54 = arith.addf %38, %53 : vector<16x128xf32>
    %55 = arith.truncf %54 : vector<16x128xf32> to vector<16x128xbf16>
    %c3 = arith.constant 3 : index
    %c0_39 = arith.constant 0 : index
    %c0_40 = arith.constant 0 : index
    %56 = vector.load %arg2[%c3, %c0_39, %c0_40] : memref<4x128x128xbf16, #tpu.memory_space<vmem>>, vector<1x128x128xbf16>
    %57 = vector.shape_cast %56 : vector<1x128x128xbf16> to vector<128x128xbf16>
    %cst_41 = arith.constant dense<0.000000e+00> : vector<16x128xf32>
    %58 = tpu.matmul %55, %57, %cst_41 {dimension_numbers = #tpu.dot_dimension_numbers<[1], [0], [0], [1], [0, 0, 1, 1], [], []>} : vector<16x128xbf16>, vector<128x128xbf16>, vector<16x128xf32> -> vector<16x128xf32>
    %c3_42 = arith.constant 3 : index
    %c0_43 = arith.constant 0 : index
    %59 = vector.load %arg3[%c3_42, %c0_43] : memref<4x128xf32, #tpu.memory_space<vmem>>, vector<1x128xf32>
    %60 = vector.broadcast %59 : vector<1x128xf32> to vector<16x128xf32>
    %61 = arith.addf %58, %60 : vector<16x128xf32>
    %62 = arith.truncf %61 : vector<16x128xf32> to vector<16x128xbf16>
    %63 = math.tanh %62 : vector<16x128xbf16>
    %c3_44 = arith.constant 3 : index
    %c0_45 = arith.constant 0 : index
    %c0_46 = arith.constant 0 : index
    %64 = vector.load %arg4[%c3_44, %c0_45, %c0_46] : memref<4x128x128xbf16, #tpu.memory_space<vmem>>, vector<1x128x128xbf16>
    %65 = vector.shape_cast %64 : vector<1x128x128xbf16> to vector<128x128xbf16>
    %cst_47 = arith.constant dense<0.000000e+00> : vector<16x128xf32>
    %66 = tpu.matmul %63, %65, %cst_47 {dimension_numbers = #tpu.dot_dimension_numbers<[1], [0], [0], [1], [0, 0, 1, 1], [], []>} : vector<16x128xbf16>, vector<128x128xbf16>, vector<16x128xf32> -> vector<16x128xf32>
    %c3_48 = arith.constant 3 : index
    %c0_49 = arith.constant 0 : index
    %67 = vector.load %arg5[%c3_48, %c0_49] : memref<4x128xf32, #tpu.memory_space<vmem>>, vector<1x128xf32>
    %68 = vector.broadcast %67 : vector<1x128xf32> to vector<16x128xf32>
    %69 = arith.addf %66, %68 : vector<16x128xf32>
    %70 = arith.addf %54, %69 : vector<16x128xf32>
    %71 = arith.truncf %70 : vector<16x128xf32> to vector<16x128xbf16>
    %c0_50 = arith.constant 0 : index
    %c0_51 = arith.constant 0 : index
    %72 = vector.load %arg6[%c0_50, %c0_51] : memref<128x128xbf16, #tpu.memory_space<vmem>>, vector<128x128xbf16>
    %cst_52 = arith.constant dense<0.000000e+00> : vector<16x128xf32>
    %73 = tpu.matmul %71, %72, %cst_52 {dimension_numbers = #tpu.dot_dimension_numbers<[1], [0], [0], [1], [0, 0, 1, 1], [], []>} : vector<16x128xbf16>, vector<128x128xbf16>, vector<16x128xf32> -> vector<16x128xf32>
    %c0_53 = arith.constant 0 : index
    %c0_54 = arith.constant 0 : index
    %74 = vector.load %arg7[%c0_53, %c0_54] : memref<1x128xf32, #tpu.memory_space<vmem>>, vector<1x128xf32>
    %75 = vector.broadcast %74 : vector<1x128xf32> to vector<16x128xf32>
    %76 = arith.addf %73, %75 : vector<16x128xf32>
    %77 = vector.extract_strided_slice %76 {offsets = [0, 0], sizes = [16, 4], strides = [1, 1]} : vector<16x128xf32> to vector<16x4xf32>
    %c0_55 = arith.constant 0 : index
    %c0_56 = arith.constant 0 : index
    %78 = vector.load %arg8[%c0_55, %c0_56] : memref<16x4xf32, #tpu.memory_space<vmem>>, vector<16x4xf32>
    tpu.vector_store %arg8[%c0_55, %c0_56], %77 {strides = array<i32>} : memref<16x4xf32, #tpu.memory_space<vmem>>, vector<16x4xf32>,
    return
  }
  func.func @transform_0(%arg0: i32) -> (i32, i32) {
    %c0_i32 = arith.constant 0 : i32
    %c0_i32_0 = arith.constant 0 : i32
    return %arg0, %c0_i32 : i32, i32
  }
  func.func @transform_1(%arg0: i32) -> (i32, i32, i32) {
    %c0_i32 = arith.constant 0 : i32
    %c0_i32_0 = arith.constant 0 : i32
    %c0_i32_1 = arith.constant 0 : i32
    %c0_i32_2 = arith.constant 0 : i32
    return %c0_i32, %c0_i32_0, %c0_i32_1 : i32, i32, i32
  }
  func.func @transform_2(%arg0: i32) -> (i32, i32) {
    %c0_i32 = arith.constant 0 : i32
    %c0_i32_0 = arith.constant 0 : i32
    %c0_i32_1 = arith.constant 0 : i32
    return %c0_i32, %c0_i32_0 : i32, i32
  }
  func.func @transform_3(%arg0: i32) -> (i32, i32, i32) {
    %c0_i32 = arith.constant 0 : i32
    %c0_i32_0 = arith.constant 0 : i32
    %c0_i32_1 = arith.constant 0 : i32
    %c0_i32_2 = arith.constant 0 : i32
    return %c0_i32, %c0_i32_0, %c0_i32_1 : i32, i32, i32
  }
  func.func @transform_4(%arg0: i32) -> (i32, i32) {
    %c0_i32 = arith.constant 0 : i32
    %c0_i32_0 = arith.constant 0 : i32
    %c0_i32_1 = arith.constant 0 : i32
    return %c0_i32, %c0_i32_0 : i32, i32
  }
  func.func @transform_5(%arg0: i32) -> (i32, i32) {
    %c0_i32 = arith.constant 0 : i32
    %c0_i32_0 = arith.constant 0 : i32
    %c0_i32_1 = arith.constant 0 : i32
    return %c0_i32, %c0_i32_0 : i32, i32
  }
  func.func @transform_6(%arg0: i32) -> (i32, i32) {
    %c0_i32 = arith.constant 0 : i32
    %c0_i32_0 = arith.constant 0 : i32
    %c0_i32_1 = arith.constant 0 : i32
    return %c0_i32, %c0_i32_0 : i32, i32
  }
  func.func @transform_7(%arg0: i32) -> (i32, i32) {
    %c0_i32 = arith.constant 0 : i32
    %c0_i32_0 = arith.constant 0 : i32
    return %arg0, %c0_i32 : i32, i32
  }
}

</mosaic_0001>

<llo_original>
// kernel: multiblock_regressor.1
$region0: #{multiblock_regressor.1}
  #allocation0 [shape = 'u32[]', space=smem, size = 0x4, offset = 0x4, fixed_abs, tag = 'smem constant byte address 0x4 - core index']
  #allocation1 [shape = 'u32[144,128]{1,0:T(1,128)}', space=vmem, size = 0x12000, scoped, tag = 'internal scratch']
  #allocation2 [shape = 'f32[16,128]{1,0:T(8,128)}', space=vmem, size = 0x2000, scoped, tag = 'scratch operand']
  %s0 = inlined_call_operand.vmem [shape: bf16[16,8], index: 0, kind: input, shape index: {}]
  %s1 = inlined_call_operand.hbm [shape: bf16[4,128,128], index: 1, kind: input, shape index: {}]
  %s2 = inlined_call_operand.vmem [shape: f32[4,128], index: 2, kind: input, shape index: {}]
  %s3 = inlined_call_operand.hbm [shape: bf16[4,128,128], index: 3, kind: input, shape index: {}]
  %s4 = inlined_call_operand.vmem [shape: f32[4,128], index: 4, kind: input, shape index: {}]
  %s5 = inlined_call_operand.hbm [shape: bf16[128,128], index: 5, kind: input, shape index: {}]
  %s6 = inlined_call_operand.vmem [shape: f32[1,128], index: 6, kind: input, shape index: {}]
  %s7 = inlined_call_operand.vmem [shape: f32[16,4], index: 7, kind: output, shape index: {}]
  %s8 = sld [smem:[#allocation0]]
  $region54: #{multiblock_regressor.1} parent=0
    _
  %s10 = ssub.s32 1, %s8
  %s11 = scalar_select 0, %s10, %s8
  $region1: #{multiblock_regressor.1} parent=0
    #allocation3 [shape = 'u8[131072]{0}', space=vmem, size = 0x20000, scoped, tag = 'input window, operand 1, single buffered']
    #allocation4 [shape = 's32[1]{0}', space=sflag, size = 0x4, scoped, tag = 'scoped memory for multiblock_regressor.1']
    #allocation5 [shape = 'u8[131072]{0}', space=vmem, size = 0x20000, scoped, tag = 'input window, operand 3, single buffered']
    #allocation6 [shape = 's32[1]{0}', space=sflag, size = 0x4, scoped, tag = 'scoped memory for multiblock_regressor.1']
    #allocation7 [shape = 'u8[32768]{0}', space=vmem, size = 0x8000, scoped, tag = 'input window, operand 5, single buffered']
    %12 = vsyncpa [#allocation4], 0
    %13 = vsyncpa [#allocation6], 0
    // Predicated region
    $region2: #{multiblock_regressor.1} parent=1 // pred_check
      _
    $region3: #{multiblock_regressor.1} parent=1 // pred_check_branch
      %15 = sbr.rel (0) target = $region5
    $region4: #{multiblock_regressor.1} parent=1 // pred_region
      _
    $region5: #{multiblock_regressor.1} parent=1 // pred_fallthru
      _
    // Predicated region
    $region6: #{multiblock_regressor.1} parent=1 // pred_check
      _
    $region7: #{multiblock_regressor.1} parent=1 // pred_check_branch
      %17 = sbr.rel (0) target = $region9
    $region8: #{multiblock_regressor.1} parent=1 // pred_region
      %s19 = ssub.s32 4096, 4096
      %20 = vsyncadd [#allocation4], %s19
      %s21 = sshll.u32 [#allocation3], 4
      %s22 = int_to_ptr.vmem [resolvable:$true] %s21
      %27 = dma.hbm_to_vmem [thread:$0]  %s1, 4096, %s22, [#allocation4], 64, 64, 4
    $region9: #{multiblock_regressor.1} parent=1 // pred_fallthru
      _
    // Predicated region
    $region10: #{multiblock_regressor.1} parent=1 // pred_check
      _
    $region11: #{multiblock_regressor.1} parent=1 // pred_check_branch
      %29 = sbr.rel (0) target = $region13
    $region12: #{multiblock_regressor.1} parent=1 // pred_region
      _
    $region13: #{multiblock_regressor.1} parent=1 // pred_fallthru
      _
    // Predicated region
    $region14: #{multiblock_regressor.1} parent=1 // pred_check
      _
    $region15: #{multiblock_regressor.1} parent=1 // pred_check_branch
      %31 = sbr.rel (0) target = $region17
    $region16: #{multiblock_regressor.1} parent=1 // pred_region
      %s33 = ssub.s32 4096, 4096
      %34 = vsyncadd [#allocation6], %s33
      %s35 = sshll.u32 [#allocation5], 4
      %s36 = int_to_ptr.vmem [resolvable:$true] %s35
      %41 = dma.hbm_to_vmem [thread:$0]  %s3, 4096, %s36, [#allocation6], 64, 64, 4
    $region17: #{multiblock_regressor.1} parent=1 // pred_fallthru
      _
    // Predicated region
    $region18: #{multiblock_regressor.1} parent=1 // pred_check
      _
    $region19: #{multiblock_regressor.1} parent=1 // pred_check_branch
      %43 = sbr.rel (0) target = $region21
    $region20: #{multiblock_regressor.1} parent=1 // pred_region
      _
    $region21: #{multiblock_regressor.1} parent=1 // pred_fallthru
      _
    // Predicated region
    $region22: #{multiblock_regressor.1} parent=1 // pred_check
      _
    $region23: #{multiblock_regressor.1} parent=1 // pred_check_branch
      %45 = sbr.rel (0) target = $region25
    $region24: #{multiblock_regressor.1} parent=1 // pred_region
      %s47 = ssub.s32 1024, 1024
      %48 = vsyncadd [#allocation6], %s47
      %s49 = sshll.u32 [#allocation7], 4
      %s50 = int_to_ptr.vmem [resolvable:$true] %s49
      %55 = dma.hbm_to_vmem [thread:$0]  %s5, 1024, %s50, [#allocation6], 64, 64, 4
    $region25: #{multiblock_regressor.1} parent=1 // pred_fallthru
      _
    // Predicated region
    $region26: #{multiblock_regressor.1} parent=1 // pred_check
      _
    $region27: #{multiblock_regressor.1} parent=1 // pred_check_branch
      %57 = sbr.rel (0) target = $region29
    $region28: #{multiblock_regressor.1} parent=1 // pred_region
      _
    $region29: #{multiblock_regressor.1} parent=1 // pred_fallthru
      _
    // Predicated region
    $region30: #{multiblock_regressor.1} parent=1 // pred_check
      _
    $region31: #{multiblock_regressor.1} parent=1 // pred_check_branch
      %59 = sbr.rel (0) target = $region33
    $region32: #{multiblock_regressor.1} parent=1 // pred_region
      %60 = dma.done [#allocation4], 4096
    $region33: #{multiblock_regressor.1} parent=1 // pred_fallthru
      _
    // Predicated region
    $region34: #{multiblock_regressor.1} parent=1 // pred_check
      _
    $region35: #{multiblock_regressor.1} parent=1 // pred_check_branch
      %62 = sbr.rel (0) target = $region37
    $region36: #{multiblock_regressor.1} parent=1 // pred_region
      %63 = dma.done [#allocation6], 4096
    $region37: #{multiblock_regressor.1} parent=1 // pred_fallthru
      _
    // Predicated region
    $region38: #{multiblock_regressor.1} parent=1 // pred_check
      _
    $region39: #{multiblock_regressor.1} parent=1 // pred_check_branch
      %65 = sbr.rel (0) target = $region41
    $region40: #{multiblock_regressor.1} parent=1 // pred_region
      %66 = dma.done [#allocation6], 1024
    $region41: #{multiblock_regressor.1} parent=1 // pred_fallthru
      _
    %p68 = scmp.eq.s32.totalorder 0, 0
    // Predicated region
    $region42: #{multiblock_regressor.1} parent=1 // pred_check
      %p69 = pneg %p68
    $region43: #{multiblock_regressor.1} parent=1 // pred_check_branch
      %71 = sbr.rel (%p69) target = $region45
    $region44: #{multiblock_regressor.1} parent=1 // pred_region
      %72 = vst [vmem:[#allocation2] sm:$0xff] 0.0
      %73 = vst [vmem:[#allocation2 + $0x8] sm:$0xff] 0.0
    $region45: #{multiblock_regressor.1} parent=1 // pred_fallthru
      _
    %v74 = vld [vmem:[%s0] sm:$0xf]
    %v75 = vld [vmem:[%s0 + $0x4] sm:$0xf]
    %v76 = vunpack.c.l.bf16 %v74
    %v77 = vunpack.c.l.bf16 %v75
    %vm78 = vcmask 64512
    %79 = vst.msk [vmem:[#allocation2] sm:$0xff] %vm78, %v76
    %80 = vst.msk [vmem:[#allocation2 + $0x8] sm:$0xff] %vm78, %v77
    %v81 = vld [vmem:[#allocation2] sm:$0xff]
    %v82 = vld [vmem:[#allocation2 + $0x8] sm:$0xff]
    %v83 = vpack.c.bf16 %v82, %v81
    %v84 = vld [vmem:[#allocation3] sm:$0xf]
    %v85 = vld [vmem:[#allocation3 + $0x4] sm:$0xf]
    %v86 = vld [vmem:[#allocation3 + $0x8] sm:$0xf]
    %v87 = vld [vmem:[#allocation3 + $0xc] sm:$0xf]
    %v88 = vld [vmem:[#allocation3 + $0x10] sm:$0xf]
    %v89 = vld [vmem:[#allocation3 + $0x14] sm:$0xf]
    %v90 = vld [vmem:[#allocation3 + $0x18] sm:$0xf]
    %v91 = vld [vmem:[#allocation3 + $0x1c] sm:$0xf]
    %v92 = vld [vmem:[#allocation3 + $0x20] sm:$0xf]
    %v93 = vld [vmem:[#allocation3 + $0x24] sm:$0xf]
    %v94 = vld [vmem:[#allocation3 + $0x28] sm:$0xf]
    %v95 = vld [vmem:[#allocation3 + $0x2c] sm:$0xf]
    %v96 = vld [vmem:[#allocation3 + $0x30] sm:$0xf]
    %v97 = vld [vmem:[#allocation3 + $0x34] sm:$0xf]
    %v98 = vld [vmem:[#allocation3 + $0x38] sm:$0xf]
    %v99 = vld [vmem:[#allocation3 + $0x3c] sm:$0xf]
    %v100 = vld [vmem:[%s2] sm:$0x1]
    %v101 = vlaneseq
    %v102 = vshrl.u32 %v101, 7
    %v103 = vsub.s32 0, %v102
    %v104 = vrot.slane %v100, %v103
    %v121 = vunpack.c.l.b16 %v84
    %v122 = vunpack.c.l.b16 %v85
    %v123 = vunpack.c.l.b16 %v86
    %v124 = vunpack.c.l.b16 %v87
    %v125 = vunpack.c.l.b16 %v88
    %v126 = vunpack.c.l.b16 %v89
    %v127 = vunpack.c.l.b16 %v90
    %v128 = vunpack.c.l.b16 %v91
    %v129 = vunpack.c.l.b16 %v92
    %v130 = vunpack.c.l.b16 %v93
    %v131 = vunpack.c.l.b16 %v94
    %v132 = vunpack.c.l.b16 %v95
    %v133 = vunpack.c.l.b16 %v96
    %v134 = vunpack.c.l.b16 %v97
    %v135 = vunpack.c.l.b16 %v98
    %v136 = vunpack.c.l.b16 %v99
    %v137 = vpack.c.b16 %v122, %v121
    %v138 = vpack.c.b16 %v124, %v123
    %v139 = vpack.c.b16 %v126, %v125
    %v140 = vpack.c.b16 %v128, %v127
    %v141 = vpack.c.b16 %v130, %v129
    %v142 = vpack.c.b16 %v132, %v131
    %v143 = vpack.c.b16 %v134, %v133
    %v144 = vpack.c.b16 %v136, %v135
    %153 = vmatprep.subr.bf16.mxu0 0
    %154 = vmatpush1.bf16.msra.mxu0 %v137
    %155 = vmatprep.subr.bf16.mxu0 0
    %156 = vmatpush1.bf16.msra.mxu0 %v138
    %157 = vmatprep.subr.bf16.mxu0 0
    %158 = vmatpush1.bf16.msra.mxu0 %v139
    %159 = vmatprep.subr.bf16.mxu0 0
    %160 = vmatpush1.bf16.msra.mxu0 %v140
    %161 = vmatprep.subr.bf16.mxu0 0
    %162 = vmatpush1.bf16.msra.mxu0 %v141
    %163 = vmatprep.subr.bf16.mxu0 0
    %164 = vmatpush1.bf16.msra.mxu0 %v142
    %165 = vmatprep.subr.bf16.mxu0 0
    %166 = vmatpush1.bf16.msra.mxu0 %v143
    %167 = vmatprep.subr.bf16.mxu0 0
    %168 = vmatpush1.bf16.msra.mxu0 %v144
    %169 = vmatprep.subr.bf16.mxu0 0
    %170 = vmatpush1.bf16.msra.mxu0 0
    %171 = vmatprep.subr.bf16.mxu0 0
    %172 = vmatpush1.bf16.msra.mxu0 0
    %173 = vmatprep.subr.bf16.mxu0 0
    %174 = vmatpush1.bf16.msra.mxu0 0
    %175 = vmatprep.subr.bf16.mxu0 0
    %176 = vmatpush1.bf16.msra.mxu0 0
    %177 = vmatprep.subr.bf16.mxu0 0
    %178 = vmatpush1.bf16.msra.mxu0 0
    %179 = vmatprep.subr.bf16.mxu0 0
    %180 = vmatpush1.bf16.msra.mxu0 0
    %181 = vmatprep.subr.bf16.mxu0 0
    %182 = vmatpush1.bf16.msra.mxu0 0
    %183 = vmatprep.subr.bf16.mxu0 0
    %184 = vmatpush1.bf16.msra.mxu0 0
    %185 = vmatprep.mubr.bf16.mxu0 0
    %186 = vmatmul.mubr.bf16.gmra.mrb[0].mxu0 %v83
    %v187 = vpop.f32.mrb[0].mxu0
    %v188 = vadd.f32 %v104, %v187
    %v189 = vpop.f32.mrb[0].mxu0
    %v190 = vpop.f32.mrb[0].mxu0
    %v191 = vadd.f32 %v104, %v190
    %v192 = vpop.f32.mrb[0].mxu0
    %193 = vdwg.mxu0
    %v194 = vpack.c.bf16 %v191, %v188
    %v195 = vtanh.bf16.pop %v194
    %v196 = vld [vmem:[#allocation5] sm:$0xf]
    %v197 = vld [vmem:[#allocation5 + $0x4] sm:$0xf]
    %v198 = vld [vmem:[#allocation5 + $0x8] sm:$0xf]
    %v199 = vld [vmem:[#allocation5 + $0xc] sm:$0xf]
    %v200 = vld [vmem:[#allocation5 + $0x10] sm:$0xf]
    %v201 = vld [vmem:[#allocation5 + $0x14] sm:$0xf]
    %v202 = vld [vmem:[#allocation5 + $0x18] sm:$0xf]
    %v203 = vld [vmem:[#allocation5 + $0x1c] sm:$0xf]
    %v204 = vld [vmem:[#allocation5 + $0x20] sm:$0xf]
    %v205 = vld [vmem:[#allocation5 + $0x24] sm:$0xf]
    %v206 = vld [vmem:[#allocation5 + $0x28] sm:$0xf]
    %v207 = vld [vmem:[#allocation5 + $0x2c] sm:$0xf]
    %v208 = vld [vmem:[#allocation5 + $0x30] sm:$0xf]
    %v209 = vld [vmem:[#allocation5 + $0x34] sm:$0xf]
    %v210 = vld [vmem:[#allocation5 + $0x38] sm:$0xf]
    %v211 = vld [vmem:[#allocation5 + $0x3c] sm:$0xf]
    %v212 = vld [vmem:[%s4] sm:$0x1]
    %v213 = vlaneseq
    %v214 = vshrl.u32 %v213, 7
    %v215 = vsub.s32 0, %v214
    %v216 = vrot.slane %v212, %v215
    %v233 = vunpack.c.l.b16 %v196
    %v234 = vunpack.c.l.b16 %v197
    %v235 = vunpack.c.l.b16 %v198
    %v236 = vunpack.c.l.b16 %v199
    %v237 = vunpack.c.l.b16 %v200
    %v238 = vunpack.c.l.b16 %v201
    %v239 = vunpack.c.l.b16 %v202
    %v240 = vunpack.c.l.b16 %v203
    %v241 = vunpack.c.l.b16 %v204
    %v242 = vunpack.c.l.b16 %v205
    %v243 = vunpack.c.l.b16 %v206
    %v244 = vunpack.c.l.b16 %v207
    %v245 = vunpack.c.l.b16 %v208
    %v246 = vunpack.c.l.b16 %v209
    %v247 = vunpack.c.l.b16 %v210
    %v248 = vunpack.c.l.b16 %v211
    %v249 = vpack.c.b16 %v234, %v233
    %v250 = vpack.c.b16 %v236, %v235
    %v251 = vpack.c.b16 %v238, %v237
    %v252 = vpack.c.b16 %v240, %v239
    %v253 = vpack.c.b16 %v242, %v241
    %v254 = vpack.c.b16 %v244, %v243
    %v255 = vpack.c.b16 %v246, %v245
    %v256 = vpack.c.b16 %v248, %v247
    %265 = vmatprep.subr.bf16.mxu0 0
    %266 = vmatpush1.bf16.msra.mxu0 %v249
    %267 = vmatprep.subr.bf16.mxu0 0
    %268 = vmatpush1.bf16.msra.mxu0 %v250
    %269 = vmatprep.subr.bf16.mxu0 0
    %270 = vmatpush1.bf16.msra.mxu0 %v251
    %271 = vmatprep.subr.bf16.mxu0 0
    %272 = vmatpush1.bf16.msra.mxu0 %v252
    %273 = vmatprep.subr.bf16.mxu0 0
    %274 = vmatpush1.bf16.msra.mxu0 %v253
    %275 = vmatprep.subr.bf16.mxu0 0
    %276 = vmatpush1.bf16.msra.mxu0 %v254
    %277 = vmatprep.subr.bf16.mxu0 0
    %278 = vmatpush1.bf16.msra.mxu0 %v255
    %279 = vmatprep.subr.bf16.mxu0 0
    %280 = vmatpush1.bf16.msra.mxu0 %v256
    %281 = vmatprep.subr.bf16.mxu0 0
    %282 = vmatpush1.bf16.msra.mxu0 0
    %283 = vmatprep.subr.bf16.mxu0 0
    %284 = vmatpush1.bf16.msra.mxu0 0
    %285 = vmatprep.subr.bf16.mxu0 0
    %286 = vmatpush1.bf16.msra.mxu0 0
    %287 = vmatprep.subr.bf16.mxu0 0
    %288 = vmatpush1.bf16.msra.mxu0 0
    %289 = vmatprep.subr.bf16.mxu0 0
    %290 = vmatpush1.bf16.msra.mxu0 0
    %291 = vmatprep.subr.bf16.mxu0 0
    %292 = vmatpush1.bf16.msra.mxu0 0
    %293 = vmatprep.subr.bf16.mxu0 0
    %294 = vmatpush1.bf16.msra.mxu0 0
    %295 = vmatprep.subr.bf16.mxu0 0
    %296 = vmatpush1.bf16.msra.mxu0 0
    %297 = vmatprep.mubr.bf16.mxu0 0
    %298 = vmatmul.mubr.bf16.gmra.mrb[0].mxu0 %v195
    %v299 = vpop.f32.mrb[0].mxu0
    %v300 = vadd.f32 %v216, %v299
    %v301 = vpop.f32.mrb[0].mxu0
    %v302 = vpop.f32.mrb[0].mxu0
    %v303 = vadd.f32 %v216, %v302
    %v304 = vpop.f32.mrb[0].mxu0
    %305 = vdwg.mxu0
    %v306 = vadd.f32 %v81, %v300
    %v307 = vadd.f32 %v82, %v303
    %v308 = vpack.c.bf16 %v307, %v306
    %s309 = scalar_lea.vmem [#allocation3], 64
    %v310 = vld [vmem:[%s309] sm:$0xf]
    %v311 = vld [vmem:[%s309 + $0x4] sm:$0xf]
    %v312 = vld [vmem:[%s309 + $0x8] sm:$0xf]
    %v313 = vld [vmem:[%s309 + $0xc] sm:$0xf]
    %v314 = vld [vmem:[%s309 + $0x10] sm:$0xf]
    %v315 = vld [vmem:[%s309 + $0x14] sm:$0xf]
    %v316 = vld [vmem:[%s309 + $0x18] sm:$0xf]
    %v317 = vld [vmem:[%s309 + $0x1c] sm:$0xf]
    %v318 = vld [vmem:[%s309 + $0x20] sm:$0xf]
    %v319 = vld [vmem:[%s309 + $0x24] sm:$0xf]
    %v320 = vld [vmem:[%s309 + $0x28] sm:$0xf]
    %v321 = vld [vmem:[%s309 + $0x2c] sm:$0xf]
    %v322 = vld [vmem:[%s309 + $0x30] sm:$0xf]
    %v323 = vld [vmem:[%s309 + $0x34] sm:$0xf]
    %v324 = vld [vmem:[%s309 + $0x38] sm:$0xf]
    %v325 = vld [vmem:[%s309 + $0x3c] sm:$0xf]
    %v326 = vld [vmem:[%s2 + $0x1] sm:$0x1]
    %v327 = vlaneseq
    %v328 = vshrl.u32 %v327, 7
    %v329 = vsub.s32 0, %v328
    %v330 = vrot.slane %v326, %v329
    %v347 = vunpack.c.l.b16 %v310
    %v348 = vunpack.c.l.b16 %v311
    %v349 = vunpack.c.l.b16 %v312
    %v350 = vunpack.c.l.b16 %v313
    %v351 = vunpack.c.l.b16 %v314
    %v352 = vunpack.c.l.b16 %v315
    %v353 = vunpack.c.l.b16 %v316
    %v354 = vunpack.c.l.b16 %v317
    %v355 = vunpack.c.l.b16 %v318
    %v356 = vunpack.c.l.b16 %v319
    %v357 = vunpack.c.l.b16 %v320
    %v358 = vunpack.c.l.b16 %v321
    %v359 = vunpack.c.l.b16 %v322
    %v360 = vunpack.c.l.b16 %v323
    %v361 = vunpack.c.l.b16 %v324
    %v362 = vunpack.c.l.b16 %v325
    %v363 = vpack.c.b16 %v348, %v347
    %v364 = vpack.c.b16 %v350, %v349
    %v365 = vpack.c.b16 %v352, %v351
    %v366 = vpack.c.b16 %v354, %v353
    %v367 = vpack.c.b16 %v356, %v355
    %v368 = vpack.c.b16 %v358, %v357
    %v369 = vpack.c.b16 %v360, %v359
    %v370 = vpack.c.b16 %v362, %v361
    %379 = vmatprep.subr.bf16.mxu0 0
    %380 = vmatpush1.bf16.msra.mxu0 %v363
    %381 = vmatprep.subr.bf16.mxu0 0
    %382 = vmatpush1.bf16.msra.mxu0 %v364
    %383 = vmatprep.subr.bf16.mxu0 0
    %384 = vmatpush1.bf16.msra.mxu0 %v365
    %385 = vmatprep.subr.bf16.mxu0 0
    %386 = vmatpush1.bf16.msra.mxu0 %v366
    %387 = vmatprep.subr.bf16.mxu0 0
    %388 = vmatpush1.bf16.msra.mxu0 %v367
    %389 = vmatprep.subr.bf16.mxu0 0
    %390 = vmatpush1.bf16.msra.mxu0 %v368
    %391 = vmatprep.subr.bf16.mxu0 0
    %392 = vmatpush1.bf16.msra.mxu0 %v369
    %393 = vmatprep.subr.bf16.mxu0 0
    %394 = vmatpush1.bf16.msra.mxu0 %v370
    %395 = vmatprep.subr.bf16.mxu0 0
    %396 = vmatpush1.bf16.msra.mxu0 0
    %397 = vmatprep.subr.bf16.mxu0 0
    %398 = vmatpush1.bf16.msra.mxu0 0
    %399 = vmatprep.subr.bf16.mxu0 0
    %400 = vmatpush1.bf16.msra.mxu0 0
    %401 = vmatprep.subr.bf16.mxu0 0
    %402 = vmatpush1.bf16.msra.mxu0 0
    %403 = vmatprep.subr.bf16.mxu0 0
    %404 = vmatpush1.bf16.msra.mxu0 0
    %405 = vmatprep.subr.bf16.mxu0 0
    %406 = vmatpush1.bf16.msra.mxu0 0
    %407 = vmatprep.subr.bf16.mxu0 0
    %408 = vmatpush1.bf16.msra.mxu0 0
    %409 = vmatprep.subr.bf16.mxu0 0
    %410 = vmatpush1.bf16.msra.mxu0 0
    %411 = vmatprep.mubr.bf16.mxu0 0
    %412 = vmatmul.mubr.bf16.gmra.mrb[0].mxu0 %v308
    %v413 = vpop.f32.mrb[0].mxu0
    %v414 = vadd.f32 %v330, %v413
    %v415 = vpop.f32.mrb[0].mxu0
    %v416 = vpop.f32.mrb[0].mxu0
    %v417 = vadd.f32 %v330, %v416
    %v418 = vpop.f32.mrb[0].mxu0
    %419 = vdwg.mxu0
    %v420 = vpack.c.bf16 %v417, %v414
    %v421 = vtanh.bf16.pop %v420
    %s422 = scalar_lea.vmem [#allocation5], 64
    %v423 = vld [vmem:[%s422] sm:$0xf]
    %v424 = vld [vmem:[%s422 + $0x4] sm:$0xf]
    %v425 = vld [vmem:[%s422 + $0x8] sm:$0xf]
    %v426 = vld [vmem:[%s422 + $0xc] sm:$0xf]
    %v427 = vld [vmem:[%s422 + $0x10] sm:$0xf]
    %v428 = vld [vmem:[%s422 + $0x14] sm:$0xf]
    %v429 = vld [vmem:[%s422 + $0x18] sm:$0xf]
    %v430 = vld [vmem:[%s422 + $0x1c] sm:$0xf]
    %v431 = vld [vmem:[%s422 + $0x20] sm:$0xf]
    %v432 = vld [vmem:[%s422 + $0x24] sm:$0xf]
    %v433 = vld [vmem:[%s422 + $0x28] sm:$0xf]
    %v434 = vld [vmem:[%s422 + $0x2c] sm:$0xf]
    %v435 = vld [vmem:[%s422 + $0x30] sm:$0xf]
    %v436 = vld [vmem:[%s422 + $0x34] sm:$0xf]
    %v437 = vld [vmem:[%s422 + $0x38] sm:$0xf]
    %v438 = vld [vmem:[%s422 + $0x3c] sm:$0xf]
    %v439 = vld [vmem:[%s4 + $0x1] sm:$0x1]
    %v440 = vlaneseq
    %v441 = vshrl.u32 %v440, 7
    %v442 = vsub.s32 0, %v441
    %v443 = vrot.slane %v439, %v442
    %v460 = vunpack.c.l.b16 %v423
    %v461 = vunpack.c.l.b16 %v424
    %v462 = vunpack.c.l.b16 %v425
    %v463 = vunpack.c.l.b16 %v426
    %v464 = vunpack.c.l.b16 %v427
    %v465 = vunpack.c.l.b16 %v428
    %v466 = vunpack.c.l.b16 %v429
    %v467 = vunpack.c.l.b16 %v430
    %v468 = vunpack.c.l.b16 %v431
    %v469 = vunpack.c.l.b16 %v432
    %v470 = vunpack.c.l.b16 %v433
    %v471 = vunpack.c.l.b16 %v434
    %v472 = vunpack.c.l.b16 %v435
    %v473 = vunpack.c.l.b16 %v436
    %v474 = vunpack.c.l.b16 %v437
    %v475 = vunpack.c.l.b16 %v438
    %v476 = vpack.c.b16 %v461, %v460
    %v477 = vpack.c.b16 %v463, %v462
    %v478 = vpack.c.b16 %v465, %v464
    %v479 = vpack.c.b16 %v467, %v466
    %v480 = vpack.c.b16 %v469, %v468
    %v481 = vpack.c.b16 %v471, %v470
    %v482 = vpack.c.b16 %v473, %v472
    %v483 = vpack.c.b16 %v475, %v474
    %492 = vmatprep.subr.bf16.mxu0 0
    %493 = vmatpush1.bf16.msra.mxu0 %v476
    %494 = vmatprep.subr.bf16.mxu0 0
    %495 = vmatpush1.bf16.msra.mxu0 %v477
    %496 = vmatprep.subr.bf16.mxu0 0
    %497 = vmatpush1.bf16.msra.mxu0 %v478
    %498 = vmatprep.subr.bf16.mxu0 0
    %499 = vmatpush1.bf16.msra.mxu0 %v479
    %500 = vmatprep.subr.bf16.mxu0 0
    %501 = vmatpush1.bf16.msra.mxu0 %v480
    %502 = vmatprep.subr.bf16.mxu0 0
    %503 = vmatpush1.bf16.msra.mxu0 %v481
    %504 = vmatprep.subr.bf16.mxu0 0
    %505 = vmatpush1.bf16.msra.mxu0 %v482
    %506 = vmatprep.subr.bf16.mxu0 0
    %507 = vmatpush1.bf16.msra.mxu0 %v483
    %508 = vmatprep.subr.bf16.mxu0 0
    %509 = vmatpush1.bf16.msra.mxu0 0
    %510 = vmatprep.subr.bf16.mxu0 0
    %511 = vmatpush1.bf16.msra.mxu0 0
    %512 = vmatprep.subr.bf16.mxu0 0
    %513 = vmatpush1.bf16.msra.mxu0 0
    %514 = vmatprep.subr.bf16.mxu0 0
    %515 = vmatpush1.bf16.msra.mxu0 0
    %516 = vmatprep.subr.bf16.mxu0 0
    %517 = vmatpush1.bf16.msra.mxu0 0
    %518 = vmatprep.subr.bf16.mxu0 0
    %519 = vmatpush1.bf16.msra.mxu0 0
    %520 = vmatprep.subr.bf16.mxu0 0
    %521 = vmatpush1.bf16.msra.mxu0 0
    %522 = vmatprep.subr.bf16.mxu0 0
    %523 = vmatpush1.bf16.msra.mxu0 0
    %524 = vmatprep.mubr.bf16.mxu0 0
    %525 = vmatmul.mubr.bf16.gmra.mrb[0].mxu0 %v421
    %v526 = vpop.f32.mrb[0].mxu0
    %v527 = vadd.f32 %v443, %v526
    %v528 = vpop.f32.mrb[0].mxu0
    %v529 = vpop.f32.mrb[0].mxu0
    %v530 = vadd.f32 %v443, %v529
    %v531 = vpop.f32.mrb[0].mxu0
    %532 = vdwg.mxu0
    %v533 = vadd.f32 %v306, %v527
    %v534 = vadd.f32 %v307, %v530
    %v535 = vpack.c.bf16 %v534, %v533
    %s536 = scalar_lea.vmem [#allocation3], 128
    %v537 = vld [vmem:[%s536] sm:$0xf]
    %v538 = vld [vmem:[%s536 + $0x4] sm:$0xf]
    %v539 = vld [vmem:[%s536 + $0x8] sm:$0xf]
    %v540 = vld [vmem:[%s536 + $0xc] sm:$0xf]
    %v541 = vld [vmem:[%s536 + $0x10] sm:$0xf]
    %v542 = vld [vmem:[%s536 + $0x14] sm:$0xf]
    %v543 = vld [vmem:[%s536 + $0x18] sm:$0xf]
    %v544 = vld [vmem:[%s536 + $0x1c] sm:$0xf]
    %v545 = vld [vmem:[%s536 + $0x20] sm:$0xf]
    %v546 = vld [vmem:[%s536 + $0x24] sm:$0xf]
    %v547 = vld [vmem:[%s536 + $0x28] sm:$0xf]
    %v548 = vld [vmem:[%s536 + $0x2c] sm:$0xf]
    %v549 = vld [vmem:[%s536 + $0x30] sm:$0xf]
    %v550 = vld [vmem:[%s536 + $0x34] sm:$0xf]
    %v551 = vld [vmem:[%s536 + $0x38] sm:$0xf]
    %v552 = vld [vmem:[%s536 + $0x3c] sm:$0xf]
    %v553 = vld [vmem:[%s2 + $0x2] sm:$0x1]
    %v554 = vlaneseq
    %v555 = vshrl.u32 %v554, 7
    %v556 = vsub.s32 0, %v555
    %v557 = vrot.slane %v553, %v556
    %v574 = vunpack.c.l.b16 %v537
    %v575 = vunpack.c.l.b16 %v538
    %v576 = vunpack.c.l.b16 %v539
    %v577 = vunpack.c.l.b16 %v540
    %v578 = vunpack.c.l.b16 %v541
    %v579 = vunpack.c.l.b16 %v542
    %v580 = vunpack.c.l.b16 %v543
    %v581 = vunpack.c.l.b16 %v544
    %v582 = vunpack.c.l.b16 %v545
    %v583 = vunpack.c.l.b16 %v546
    %v584 = vunpack.c.l.b16 %v547
    %v585 = vunpack.c.l.b16 %v548
    %v586 = vunpack.c.l.b16 %v549
    %v587 = vunpack.c.l.b16 %v550
    %v588 = vunpack.c.l.b16 %v551
    %v589 = vunpack.c.l.b16 %v552
    %v590 = vpack.c.b16 %v575, %v574
    %v591 = vpack.c.b16 %v577, %v576
    %v592 = vpack.c.b16 %v579, %v578
    %v593 = vpack.c.b16 %v581, %v580
    %v594 = vpack.c.b16 %v583, %v582
    %v595 = vpack.c.b16 %v585, %v584
    %v596 = vpack.c.b16 %v587, %v586
    %v597 = vpack.c.b16 %v589, %v588
    %606 = vmatprep.subr.bf16.mxu0 0
    %607 = vmatpush1.bf16.msra.mxu0 %v590
    %608 = vmatprep.subr.bf16.mxu0 0
    %609 = vmatpush1.bf16.msra.mxu0 %v591
    %610 = vmatprep.subr.bf16.mxu0 0
    %611 = vmatpush1.bf16.msra.mxu0 %v592
    %612 = vmatprep.subr.bf16.mxu0 0
    %613 = vmatpush1.bf16.msra.mxu0 %v593
    %614 = vmatprep.subr.bf16.mxu0 0
    %615 = vmatpush1.bf16.msra.mxu0 %v594
    %616 = vmatprep.subr.bf16.mxu0 0
    %617 = vmatpush1.bf16.msra.mxu0 %v595
    %618 = vmatprep.subr.bf16.mxu0 0
    %619 = vmatpush1.bf16.msra.mxu0 %v596
    %620 = vmatprep.subr.bf16.mxu0 0
    %621 = vmatpush1.bf16.msra.mxu0 %v597
    %622 = vmatprep.subr.bf16.mxu0 0
    %623 = vmatpush1.bf16.msra.mxu0 0
    %624 = vmatprep.subr.bf16.mxu0 0
    %625 = vmatpush1.bf16.msra.mxu0 0
    %626 = vmatprep.subr.bf16.mxu0 0
    %627 = vmatpush1.bf16.msra.mxu0 0
    %628 = vmatprep.subr.bf16.mxu0 0
    %629 = vmatpush1.bf16.msra.mxu0 0
    %630 = vmatprep.subr.bf16.mxu0 0
    %631 = vmatpush1.bf16.msra.mxu0 0
    %632 = vmatprep.subr.bf16.mxu0 0
    %633 = vmatpush1.bf16.msra.mxu0 0
    %634 = vmatprep.subr.bf16.mxu0 0
    %635 = vmatpush1.bf16.msra.mxu0 0
    %636 = vmatprep.subr.bf16.mxu0 0
    %637 = vmatpush1.bf16.msra.mxu0 0
    %638 = vmatprep.mubr.bf16.mxu0 0
    %639 = vmatmul.mubr.bf16.gmra.mrb[0].mxu0 %v535
    %v640 = vpop.f32.mrb[0].mxu0
    %v641 = vadd.f32 %v557, %v640
    %v642 = vpop.f32.mrb[0].mxu0
    %v643 = vpop.f32.mrb[0].mxu0
    %v644 = vadd.f32 %v557, %v643
    %v645 = vpop.f32.mrb[0].mxu0
    %646 = vdwg.mxu0
    %v647 = vpack.c.bf16 %v644, %v641
    %v648 = vtanh.bf16.pop %v647
    %s649 = scalar_lea.vmem [#allocation5], 128
    %v650 = vld [vmem:[%s649] sm:$0xf]
    %v651 = vld [vmem:[%s649 + $0x4] sm:$0xf]
    %v652 = vld [vmem:[%s649 + $0x8] sm:$0xf]
    %v653 = vld [vmem:[%s649 + $0xc] sm:$0xf]
    %v654 = vld [vmem:[%s649 + $0x10] sm:$0xf]
    %v655 = vld [vmem:[%s649 + $0x14] sm:$0xf]
    %v656 = vld [vmem:[%s649 + $0x18] sm:$0xf]
    %v657 = vld [vmem:[%s649 + $0x1c] sm:$0xf]
    %v658 = vld [vmem:[%s649 + $0x20] sm:$0xf]
    %v659 = vld [vmem:[%s649 + $0x24] sm:$0xf]
    %v660 = vld [vmem:[%s649 + $0x28] sm:$0xf]
    %v661 = vld [vmem:[%s649 + $0x2c] sm:$0xf]
    %v662 = vld [vmem:[%s649 + $0x30] sm:$0xf]
    %v663 = vld [vmem:[%s649 + $0x34] sm:$0xf]
    %v664 = vld [vmem:[%s649 + $0x38] sm:$0xf]
    %v665 = vld [vmem:[%s649 + $0x3c] sm:$0xf]
    %v666 = vld [vmem:[%s4 + $0x2] sm:$0x1]
    %v667 = vlaneseq
    %v668 = vshrl.u32 %v667, 7
    %v669 = vsub.s32 0, %v668
    %v670 = vrot.slane %v666, %v669
    %v687 = vunpack.c.l.b16 %v650
    %v688 = vunpack.c.l.b16 %v651
    %v689 = vunpack.c.l.b16 %v652
    %v690 = vunpack.c.l.b16 %v653
    %v691 = vunpack.c.l.b16 %v654
    %v692 = vunpack.c.l.b16 %v655
    %v693 = vunpack.c.l.b16 %v656
    %v694 = vunpack.c.l.b16 %v657
    %v695 = vunpack.c.l.b16 %v658
    %v696 = vunpack.c.l.b16 %v659
    %v697 = vunpack.c.l.b16 %v660
    %v698 = vunpack.c.l.b16 %v661
    %v699 = vunpack.c.l.b16 %v662
    %v700 = vunpack.c.l.b16 %v663
    %v701 = vunpack.c.l.b16 %v664
    %v702 = vunpack.c.l.b16 %v665
    %v703 = vpack.c.b16 %v688, %v687
    %v704 = vpack.c.b16 %v690, %v689
    %v705 = vpack.c.b16 %v692, %v691
    %v706 = vpack.c.b16 %v694, %v693
    %v707 = vpack.c.b16 %v696, %v695
    %v708 = vpack.c.b16 %v698, %v697
    %v709 = vpack.c.b16 %v700, %v699
    %v710 = vpack.c.b16 %v702, %v701
    %719 = vmatprep.subr.bf16.mxu0 0
    %720 = vmatpush1.bf16.msra.mxu0 %v703
    %721 = vmatprep.subr.bf16.mxu0 0
    %722 = vmatpush1.bf16.msra.mxu0 %v704
    %723 = vmatprep.subr.bf16.mxu0 0
    %724 = vmatpush1.bf16.msra.mxu0 %v705
    %725 = vmatprep.subr.bf16.mxu0 0
    %726 = vmatpush1.bf16.msra.mxu0 %v706
    %727 = vmatprep.subr.bf16.mxu0 0
    %728 = vmatpush1.bf16.msra.mxu0 %v707
    %729 = vmatprep.subr.bf16.mxu0 0
    %730 = vmatpush1.bf16.msra.mxu0 %v708
    %731 = vmatprep.subr.bf16.mxu0 0
    %732 = vmatpush1.bf16.msra.mxu0 %v709
    %733 = vmatprep.subr.bf16.mxu0 0
    %734 = vmatpush1.bf16.msra.mxu0 %v710
    %735 = vmatprep.subr.bf16.mxu0 0
    %736 = vmatpush1.bf16.msra.mxu0 0
    %737 = vmatprep.subr.bf16.mxu0 0
    %738 = vmatpush1.bf16.msra.mxu0 0
    %739 = vmatprep.subr.bf16.mxu0 0
    %740 = vmatpush1.bf16.msra.mxu0 0
    %741 = vmatprep.subr.bf16.mxu0 0
    %742 = vmatpush1.bf16.msra.mxu0 0
    %743 = vmatprep.subr.bf16.mxu0 0
    %744 = vmatpush1.bf16.msra.mxu0 0
    %745 = vmatprep.subr.bf16.mxu0 0
    %746 = vmatpush1.bf16.msra.mxu0 0
    %747 = vmatprep.subr.bf16.mxu0 0
    %748 = vmatpush1.bf16.msra.mxu0 0
    %749 = vmatprep.subr.bf16.mxu0 0
    %750 = vmatpush1.bf16.msra.mxu0 0
    %751 = vmatprep.mubr.bf16.mxu0 0
    %752 = vmatmul.mubr.bf16.gmra.mrb[0].mxu0 %v648
    %v753 = vpop.f32.mrb[0].mxu0
    %v754 = vadd.f32 %v670, %v753
    %v755 = vpop.f32.mrb[0].mxu0
    %v756 = vpop.f32.mrb[0].mxu0
    %v757 = vadd.f32 %v670, %v756
    %v758 = vpop.f32.mrb[0].mxu0
    %759 = vdwg.mxu0
    %v760 = vadd.f32 %v533, %v754
    %v761 = vadd.f32 %v534, %v757
    %v762 = vpack.c.bf16 %v761, %v760
    %s763 = scalar_lea.vmem [#allocation3], 192
    %v764 = vld [vmem:[%s763] sm:$0xf]
    %v765 = vld [vmem:[%s763 + $0x4] sm:$0xf]
    %v766 = vld [vmem:[%s763 + $0x8] sm:$0xf]
    %v767 = vld [vmem:[%s763 + $0xc] sm:$0xf]
    %v768 = vld [vmem:[%s763 + $0x10] sm:$0xf]
    %v769 = vld [vmem:[%s763 + $0x14] sm:$0xf]
    %v770 = vld [vmem:[%s763 + $0x18] sm:$0xf]
    %v771 = vld [vmem:[%s763 + $0x1c] sm:$0xf]
    %v772 = vld [vmem:[%s763 + $0x20] sm:$0xf]
    %v773 = vld [vmem:[%s763 + $0x24] sm:$0xf]
    %v774 = vld [vmem:[%s763 + $0x28] sm:$0xf]
    %v775 = vld [vmem:[%s763 + $0x2c] sm:$0xf]
    %v776 = vld [vmem:[%s763 + $0x30] sm:$0xf]
    %v777 = vld [vmem:[%s763 + $0x34] sm:$0xf]
    %v778 = vld [vmem:[%s763 + $0x38] sm:$0xf]
    %v779 = vld [vmem:[%s763 + $0x3c] sm:$0xf]
    %v780 = vld [vmem:[%s2 + $0x3] sm:$0x1]
    %v781 = vlaneseq
    %v782 = vshrl.u32 %v781, 7
    %v783 = vsub.s32 0, %v782
    %v784 = vrot.slane %v780, %v783
    %v801 = vunpack.c.l.b16 %v764
    %v802 = vunpack.c.l.b16 %v765
    %v803 = vunpack.c.l.b16 %v766
    %v804 = vunpack.c.l.b16 %v767
    %v805 = vunpack.c.l.b16 %v768
    %v806 = vunpack.c.l.b16 %v769
    %v807 = vunpack.c.l.b16 %v770
    %v808 = vunpack.c.l.b16 %v771
    %v809 = vunpack.c.l.b16 %v772
    %v810 = vunpack.c.l.b16 %v773
    %v811 = vunpack.c.l.b16 %v774
    %v812 = vunpack.c.l.b16 %v775
    %v813 = vunpack.c.l.b16 %v776
    %v814 = vunpack.c.l.b16 %v777
    %v815 = vunpack.c.l.b16 %v778
    %v816 = vunpack.c.l.b16 %v779
    %v817 = vpack.c.b16 %v802, %v801
    %v818 = vpack.c.b16 %v804, %v803
    %v819 = vpack.c.b16 %v806, %v805
    %v820 = vpack.c.b16 %v808, %v807
    %v821 = vpack.c.b16 %v810, %v809
    %v822 = vpack.c.b16 %v812, %v811
    %v823 = vpack.c.b16 %v814, %v813
    %v824 = vpack.c.b16 %v816, %v815
    %833 = vmatprep.subr.bf16.mxu0 0
    %834 = vmatpush1.bf16.msra.mxu0 %v817
    %835 = vmatprep.subr.bf16.mxu0 0
    %836 = vmatpush1.bf16.msra.mxu0 %v818
    %837 = vmatprep.subr.bf16.mxu0 0
    %838 = vmatpush1.bf16.msra.mxu0 %v819
    %839 = vmatprep.subr.bf16.mxu0 0
    %840 = vmatpush1.bf16.msra.mxu0 %v820
    %841 = vmatprep.subr.bf16.mxu0 0
    %842 = vmatpush1.bf16.msra.mxu0 %v821
    %843 = vmatprep.subr.bf16.mxu0 0
    %844 = vmatpush1.bf16.msra.mxu0 %v822
    %845 = vmatprep.subr.bf16.mxu0 0
    %846 = vmatpush1.bf16.msra.mxu0 %v823
    %847 = vmatprep.subr.bf16.mxu0 0
    %848 = vmatpush1.bf16.msra.mxu0 %v824
    %849 = vmatprep.subr.bf16.mxu0 0
    %850 = vmatpush1.bf16.msra.mxu0 0
    %851 = vmatprep.subr.bf16.mxu0 0
    %852 = vmatpush1.bf16.msra.mxu0 0
    %853 = vmatprep.subr.bf16.mxu0 0
    %854 = vmatpush1.bf16.msra.mxu0 0
    %855 = vmatprep.subr.bf16.mxu0 0
    %856 = vmatpush1.bf16.msra.mxu0 0
    %857 = vmatprep.subr.bf16.mxu0 0
    %858 = vmatpush1.bf16.msra.mxu0 0
    %859 = vmatprep.subr.bf16.mxu0 0
    %860 = vmatpush1.bf16.msra.mxu0 0
    %861 = vmatprep.subr.bf16.mxu0 0
    %862 = vmatpush1.bf16.msra.mxu0 0
    %863 = vmatprep.subr.bf16.mxu0 0
    %864 = vmatpush1.bf16.msra.mxu0 0
    %865 = vmatprep.mubr.bf16.mxu0 0
    %866 = vmatmul.mubr.bf16.gmra.mrb[0].mxu0 %v762
    %v867 = vpop.f32.mrb[0].mxu0
    %v868 = vadd.f32 %v784, %v867
    %v869 = vpop.f32.mrb[0].mxu0
    %v870 = vpop.f32.mrb[0].mxu0
    %v871 = vadd.f32 %v784, %v870
    %v872 = vpop.f32.mrb[0].mxu0
    %873 = vdwg.mxu0
    %v874 = vpack.c.bf16 %v871, %v868
    %v875 = vtanh.bf16.pop %v874
    %s876 = scalar_lea.vmem [#allocation5], 192
    %v877 = vld [vmem:[%s876] sm:$0xf]
    %v878 = vld [vmem:[%s876 + $0x4] sm:$0xf]
    %v879 = vld [vmem:[%s876 + $0x8] sm:$0xf]
    %v880 = vld [vmem:[%s876 + $0xc] sm:$0xf]
    %v881 = vld [vmem:[%s876 + $0x10] sm:$0xf]
    %v882 = vld [vmem:[%s876 + $0x14] sm:$0xf]
    %v883 = vld [vmem:[%s876 + $0x18] sm:$0xf]
    %v884 = vld [vmem:[%s876 + $0x1c] sm:$0xf]
    %v885 = vld [vmem:[%s876 + $0x20] sm:$0xf]
    %v886 = vld [vmem:[%s876 + $0x24] sm:$0xf]
    %v887 = vld [vmem:[%s876 + $0x28] sm:$0xf]
    %v888 = vld [vmem:[%s876 + $0x2c] sm:$0xf]
    %v889 = vld [vmem:[%s876 + $0x30] sm:$0xf]
    %v890 = vld [vmem:[%s876 + $0x34] sm:$0xf]
    %v891 = vld [vmem:[%s876 + $0x38] sm:$0xf]
    %v892 = vld [vmem:[%s876 + $0x3c] sm:$0xf]
    %v893 = vld [vmem:[%s4 + $0x3] sm:$0x1]
    %v894 = vlaneseq
    %v895 = vshrl.u32 %v894, 7
    %v896 = vsub.s32 0, %v895
    %v897 = vrot.slane %v893, %v896
    %v914 = vunpack.c.l.b16 %v877
    %v915 = vunpack.c.l.b16 %v878
    %v916 = vunpack.c.l.b16 %v879
    %v917 = vunpack.c.l.b16 %v880
    %v918 = vunpack.c.l.b16 %v881
    %v919 = vunpack.c.l.b16 %v882
    %v920 = vunpack.c.l.b16 %v883
    %v921 = vunpack.c.l.b16 %v884
    %v922 = vunpack.c.l.b16 %v885
    %v923 = vunpack.c.l.b16 %v886
    %v924 = vunpack.c.l.b16 %v887
    %v925 = vunpack.c.l.b16 %v888
    %v926 = vunpack.c.l.b16 %v889
    %v927 = vunpack.c.l.b16 %v890
    %v928 = vunpack.c.l.b16 %v891
    %v929 = vunpack.c.l.b16 %v892
    %v930 = vpack.c.b16 %v915, %v914
    %v931 = vpack.c.b16 %v917, %v916
    %v932 = vpack.c.b16 %v919, %v918
    %v933 = vpack.c.b16 %v921, %v920
    %v934 = vpack.c.b16 %v923, %v922
    %v935 = vpack.c.b16 %v925, %v924
    %v936 = vpack.c.b16 %v927, %v926
    %v937 = vpack.c.b16 %v929, %v928
    %946 = vmatprep.subr.bf16.mxu0 0
    %947 = vmatpush1.bf16.msra.mxu0 %v930
    %948 = vmatprep.subr.bf16.mxu0 0
    %949 = vmatpush1.bf16.msra.mxu0 %v931
    %950 = vmatprep.subr.bf16.mxu0 0
    %951 = vmatpush1.bf16.msra.mxu0 %v932
    %952 = vmatprep.subr.bf16.mxu0 0
    %953 = vmatpush1.bf16.msra.mxu0 %v933
    %954 = vmatprep.subr.bf16.mxu0 0
    %955 = vmatpush1.bf16.msra.mxu0 %v934
    %956 = vmatprep.subr.bf16.mxu0 0
    %957 = vmatpush1.bf16.msra.mxu0 %v935
    %958 = vmatprep.subr.bf16.mxu0 0
    %959 = vmatpush1.bf16.msra.mxu0 %v936
    %960 = vmatprep.subr.bf16.mxu0 0
    %961 = vmatpush1.bf16.msra.mxu0 %v937
    %962 = vmatprep.subr.bf16.mxu0 0
    %963 = vmatpush1.bf16.msra.mxu0 0
    %964 = vmatprep.subr.bf16.mxu0 0
    %965 = vmatpush1.bf16.msra.mxu0 0
    %966 = vmatprep.subr.bf16.mxu0 0
    %967 = vmatpush1.bf16.msra.mxu0 0
    %968 = vmatprep.subr.bf16.mxu0 0
    %969 = vmatpush1.bf16.msra.mxu0 0
    %970 = vmatprep.subr.bf16.mxu0 0
    %971 = vmatpush1.bf16.msra.mxu0 0
    %972 = vmatprep.subr.bf16.mxu0 0
    %973 = vmatpush1.bf16.msra.mxu0 0
    %974 = vmatprep.subr.bf16.mxu0 0
    %975 = vmatpush1.bf16.msra.mxu0 0
    %976 = vmatprep.subr.bf16.mxu0 0
    %977 = vmatpush1.bf16.msra.mxu0 0
    %978 = vmatprep.mubr.bf16.mxu0 0
    %979 = vmatmul.mubr.bf16.gmra.mrb[0].mxu0 %v875
    %v980 = vpop.f32.mrb[0].mxu0
    %v981 = vadd.f32 %v897, %v980
    %v982 = vpop.f32.mrb[0].mxu0
    %v983 = vpop.f32.mrb[0].mxu0
    %v984 = vadd.f32 %v897, %v983
    %v985 = vpop.f32.mrb[0].mxu0
    %986 = vdwg.mxu0
    %v987 = vadd.f32 %v760, %v981
    %v988 = vadd.f32 %v761, %v984
    %v989 = vpack.c.bf16 %v988, %v987
    %v990 = vld [vmem:[#allocation7] sm:$0xf]
    %v991 = vld [vmem:[#allocation7 + $0x4] sm:$0xf]
    %v992 = vld [vmem:[#allocation7 + $0x8] sm:$0xf]
    %v993 = vld [vmem:[#allocation7 + $0xc] sm:$0xf]
    %v994 = vld [vmem:[#allocation7 + $0x10] sm:$0xf]
    %v995 = vld [vmem:[#allocation7 + $0x14] sm:$0xf]
    %v996 = vld [vmem:[#allocation7 + $0x18] sm:$0xf]
    %v997 = vld [vmem:[#allocation7 + $0x1c] sm:$0xf]
    %v998 = vld [vmem:[#allocation7 + $0x20] sm:$0xf]
    %v999 = vld [vmem:[#allocation7 + $0x24] sm:$0xf]
    %v1000 = vld [vmem:[#allocation7 + $0x28] sm:$0xf]
    %v1001 = vld [vmem:[#allocation7 + $0x2c] sm:$0xf]
    %v1002 = vld [vmem:[#allocation7 + $0x30] sm:$0xf]
    %v1003 = vld [vmem:[#allocation7 + $0x34] sm:$0xf]
    %v1004 = vld [vmem:[#allocation7 + $0x38] sm:$0xf]
    %v1005 = vld [vmem:[#allocation7 + $0x3c] sm:$0xf]
    %v1006 = vld [vmem:[%s6] sm:$0x1]
    %v1008 = vlaneseq
    %v1009 = vshrl.u32 %v1008, 7
    %v1010 = vsub.s32 0, %v1009
    %v1011 = vrot.slane %v1006, %v1010
    %v1029 = vunpack.c.l.b16 %v990
    %v1030 = vunpack.c.l.b16 %v991
    %v1031 = vunpack.c.l.b16 %v992
    %v1032 = vunpack.c.l.b16 %v993
    %v1033 = vunpack.c.l.b16 %v994
    %v1034 = vunpack.c.l.b16 %v995
    %v1035 = vunpack.c.l.b16 %v996
    %v1036 = vunpack.c.l.b16 %v997
    %v1037 = vunpack.c.l.b16 %v998
    %v1038 = vunpack.c.l.b16 %v999
    %v1039 = vunpack.c.l.b16 %v1000
    %v1040 = vunpack.c.l.b16 %v1001
    %v1041 = vunpack.c.l.b16 %v1002
    %v1042 = vunpack.c.l.b16 %v1003
    %v1043 = vunpack.c.l.b16 %v1004
    %v1044 = vunpack.c.l.b16 %v1005
    %v1045 = vpack.c.b16 %v1030, %v1029
    %v1046 = vpack.c.b16 %v1032, %v1031
    %v1047 = vpack.c.b16 %v1034, %v1033
    %v1048 = vpack.c.b16 %v1036, %v1035
    %v1049 = vpack.c.b16 %v1038, %v1037
    %v1050 = vpack.c.b16 %v1040, %v1039
    %v1051 = vpack.c.b16 %v1042, %v1041
    %v1052 = vpack.c.b16 %v1044, %v1043
    %1061 = vmatprep.subr.bf16.mxu0 0
    %1062 = vmatpush1.bf16.msra.mxu0 %v1045
    %1063 = vmatprep.subr.bf16.mxu0 0
    %1064 = vmatpush1.bf16.msra.mxu0 %v1046
    %1065 = vmatprep.subr.bf16.mxu0 0
    %1066 = vmatpush1.bf16.msra.mxu0 %v1047
    %1067 = vmatprep.subr.bf16.mxu0 0
    %1068 = vmatpush1.bf16.msra.mxu0 %v1048
    %1069 = vmatprep.subr.bf16.mxu0 0
    %1070 = vmatpush1.bf16.msra.mxu0 %v1049
    %1071 = vmatprep.subr.bf16.mxu0 0
    %1072 = vmatpush1.bf16.msra.mxu0 %v1050
    %1073 = vmatprep.subr.bf16.mxu0 0
    %1074 = vmatpush1.bf16.msra.mxu0 %v1051
    %1075 = vmatprep.subr.bf16.mxu0 0
    %1076 = vmatpush1.bf16.msra.mxu0 %v1052
    %1077 = vmatprep.subr.bf16.mxu0 0
    %1078 = vmatpush1.bf16.msra.mxu0 0
    %1079 = vmatprep.subr.bf16.mxu0 0
    %1080 = vmatpush1.bf16.msra.mxu0 0
    %1081 = vmatprep.subr.bf16.mxu0 0
    %1082 = vmatpush1.bf16.msra.mxu0 0
    %1083 = vmatprep.subr.bf16.mxu0 0
    %1084 = vmatpush1.bf16.msra.mxu0 0
    %1085 = vmatprep.subr.bf16.mxu0 0
    %1086 = vmatpush1.bf16.msra.mxu0 0
    %1087 = vmatprep.subr.bf16.mxu0 0
    %1088 = vmatpush1.bf16.msra.mxu0 0
    %1089 = vmatprep.subr.bf16.mxu0 0
    %1090 = vmatpush1.bf16.msra.mxu0 0
    %1091 = vmatprep.subr.bf16.mxu0 0
    %1092 = vmatpush1.bf16.msra.mxu0 0
    %1093 = vmatprep.mubr.bf16.mxu0 0
    %1094 = vmatmul.mubr.bf16.gmra.mrb[0].mxu0 %v989
    %v1095 = vpop.f32.mrb[0].mxu0
    %v1096 = vadd.f32 %v1011, %v1095
    %v1097 = vpop.f32.mrb[0].mxu0
    %v1098 = vpop.f32.mrb[0].mxu0
    %v1099 = vadd.f32 %v1011, %v1098
    %v1100 = vpop.f32.mrb[0].mxu0
    %1101 = vdwg.mxu0
    %vm1102 = vcmask 31744
    %1103 = vst.msk [vmem:[%s7] sm:$0xff] %vm1102, %v1096
    %1104 = vst.msk [vmem:[%s7 + $0x8] sm:$0xff] %vm1102, %v1099
    // Predicated region
    $region46: #{multiblock_regressor.1} parent=1 // pred_check
      _
    $region47: #{multiblock_regressor.1} parent=1 // pred_check_branch
      %1106 = sbr.rel (0) target = $region49
    $region48: #{multiblock_regressor.1} parent=1 // pred_region
      _
    $region49: #{multiblock_regressor.1} parent=1 // pred_fallthru
      _
    // Predicated region
    $region50: #{multiblock_regressor.1} parent=1 // pred_check
      _
    $region51: #{multiblock_regressor.1} parent=1 // pred_check_branch
      %1108 = sbr.rel (0) target = $region53
    $region52: #{multiblock_regressor.1} parent=1 // pred_region
      _
    $region53: #{multiblock_regressor.1} parent=1 // pred_fallthru
      _
    %1109 = vsyncpa [#allocation4], 1
    %1110 = vsyncpa [#allocation6], 1

</llo_original>
